<compile_context>
chip_gen: v7x
topology: tpu7x:2x2x1
jax: 0.10.0
libtpu: 0.0.40
codegen_flags: <defaults>
</compile_context>

<pallas_src>
import math

import jax
import jax.numpy as jnp
from jax.experimental import pallas as pl
from jax.experimental.pallas import tpu as pltpu


def mlp_kernel(x_ref, w1t_ref, b1_ref, w2_ref, b2_ref, o_ref):
    # x_ref  : [TILE_B, D]  batch tile (features on lanes), new tile each step
    # w1t_ref: [H, D]       first-layer weight, transposed, VMEM-resident
    # b1_ref : [H, 1]   w2_ref: [H, 1]   b2_ref: [1, 1]   (all f32, resident)
    # o_ref  : [1, TILE_B]  lane-dense output slab (batch on lanes)

    # hT[h, b] = sum_d w1[d, h] * x[b, d]  ->  A @ B^T on the MXU, f32 acc.
    # H=16 / D=32 underuses the MXU, but the kernel is HBM-bound on x, so the
    # matmul hides entirely under the DMA (do NOT pad it up).
    hT = jax.lax.dot_general(
        w1t_ref[...], x_ref[...],
        dimension_numbers=(((1,), (1,)), ((), ())),
        preferred_element_type=jnp.float32)                # [H, TILE_B]
    hT = jnp.maximum(hT + b1_ref[...], 0.0)                # bias + ReLU (VPU)

    # Second Linear (H -> 1): VPU multiply + sublane reduction (free under DMA).
    outT = jnp.sum(hT * w2_ref[...], axis=0, keepdims=True) + b2_ref[...]
    o_ref[...] = outT.astype(o_ref.dtype)                  # lane-dense store


def _round_up(n, m):
    return ((n + m - 1) // m) * m


def _choose_tile_b(B, tile_b_max):
    """Pick the batch tile.

    - Tiny batches: one full-array tile (block shapes == array shapes, always
      legal regardless of (8, 128) divisibility).
    - Otherwise: a multiple of 128 (unmasked lane-dense output stores), capped
      at tile_b_max (VMEM budget) and at ceil(B/2) so there are always >= 2
      grid steps to feed both v7x TensorCores.
    """
    if B <= 256:
        return B
    half = _round_up(pl.cdiv(B, 2), 128)
    return max(128, min((tile_b_max // 128) * 128, half))


def simple_nn_forward(x, w1, b1, w2, b2, *, tile_b_max=8192):
    """Pallas implementation of SimpleNN.forward.

    x : [B, input_size]  ->  [B, 1] float32

    x is streamed in its incoming dtype (f32 or bf16); no extra wrapper-side
    HBM pass (no pad, no cast of x).  tile_b_max=8192 is v5e-safe; on v6e/v7x
    it can be raised to ~16384 (still under the 32 MiB scoped VMEM default).
    """
    B, D = x.shape
    H = w1.shape[1]

    tile_b = _choose_tile_b(B, tile_b_max)
    grid = (pl.cdiv(B, tile_b),)                 # ragged trailing block is OK

    # Tiny, VMEM-resident operands; casting w1 (H*D elems) is negligible.
    w1t = w1.T.astype(x.dtype)                   # [H, D] so kernel does A @ B^T
    b1_c = b1.reshape(H, 1).astype(jnp.float32)
    w2_c = w2.reshape(H, 1).astype(jnp.float32)
    b2_c = b2.reshape(1, 1).astype(jnp.float32)

    itemsize = jnp.dtype(x.dtype).itemsize
    cost = pl.CostEstimate(
        flops=2 * B * D * H + 2 * B * H,
        transcendentals=0,
        bytes_accessed=B * D * itemsize + B * 4 + (H * D + 2 * H + 1) * 4)

    out2d = pl.pallas_call(
        mlp_kernel,
        out_shape=jax.ShapeDtypeStruct((1, B), jnp.float32),
        grid=grid,
        in_specs=[
            pl.BlockSpec((tile_b, D), lambda i: (i, 0)),   # x: new tile each step
            pl.BlockSpec((H, D), lambda i: (0, 0)),        # weights: resident
            pl.BlockSpec((H, 1), lambda i: (0, 0)),
            pl.BlockSpec((H, 1), lambda i: (0, 0)),
            pl.BlockSpec((1, 1), lambda i: (0, 0)),
        ],
        out_specs=pl.BlockSpec((1, tile_b), lambda i: (0, i)),
        compiler_params=pltpu.CompilerParams(
            dimension_semantics=("parallel",)),            # megacore on v7x
        cost_estimate=cost,
    )(x, w1t, b1_c, w2_c, b2_c)

    # Lane-dense [1, B] slab -> [B, 1] (any ragged-block garbage never reaches
    # the output: the trailing store is masked to the valid columns).
    return out2d.reshape(B, 1)


def init_params(key, input_size, hidden_size=16):
    """Deterministic init mimicking nn.Linear's U(-1/sqrt(fan_in), 1/sqrt(fan_in))."""
    k1, k2, k3, k4 = jax.random.split(key, 4)
    bound1 = 1.0 / math.sqrt(input_size)
    bound2 = 1.0 / math.sqrt(hidden_size)
    w1 = jax.random.uniform(k1, (input_size, hidden_size), jnp.float32, -bound1, bound1)
    b1 = jax.random.uniform(k2, (hidden_size,), jnp.float32, -bound1, bound1)
    w2 = jax.random.uniform(k3, (hidden_size, 1), jnp.float32, -bound2, bound2)
    b2 = jax.random.uniform(k4, (1,), jnp.float32, -bound2, bound2)
    return w1, b1, w2, b2


if __name__ == "__main__":
    key = jax.random.PRNGKey(0)
    k_x, k_p = jax.random.split(key)

    input_size, hidden_size = 32, 16
    w1, b1, w2, b2 = init_params(k_p, input_size, hidden_size)

    def ref_forward(xx):
        h = jnp.maximum(
            jnp.dot(xx, w1, precision=jax.lax.Precision.HIGHEST) + b1, 0.0)
        return jnp.dot(h, w2, precision=jax.lax.Precision.HIGHEST) + b2

    # batch=8    : tiny single full-array tile
    # batch=200  : single ragged-free full tile (non-multiple of 8/128)
    # batch=1024 : 2 x 512-row tiles (exercises the multi-step "parallel" grid)
    # batch=1000 : ragged trailing block on a multi-step grid
    for batch, kw in ((8, {}), (200, {}), (1024, {}), (1000, {"tile_b_max": 512})):
        x = jax.random.normal(jax.random.fold_in(k_x, batch),
                              (batch, input_size), jnp.float32)
        out = jax.block_until_ready(simple_nn_forward(x, w1, b1, w2, b2, **kw))
        ref = ref_forward(x)
        assert out.shape == (batch, 1)
        assert jnp.allclose(out, ref, atol=2e-3, rtol=2e-3), (
            batch, float(jnp.abs(out - ref).max()))

    # bf16 path only when x already arrives in bf16 (no extra wrapper cast pass).
    xb = jax.random.normal(jax.random.fold_in(k_x, 7), (512, input_size),
                           jnp.float32).astype(jnp.bfloat16)
    out_bf16 = jax.block_until_ready(simple_nn_forward(xb, w1, b1, w2, b2))
    assert jnp.allclose(out_bf16, ref_forward(xb.astype(jnp.float32)),
                        atol=5e-2, rtol=5e-2)

    print("KERNEL_OK")
</pallas_src>

<mosaic_0001>
module attributes {stable_mosaic.version = 11 : i64} {
  func.func @mlp_kernel(%arg0: i32, %arg1: memref<8x32xf32, #tpu.memory_space<vmem>>, %arg2: memref<16x32xf32, #tpu.memory_space<vmem>>, %arg3: memref<16x1xf32, #tpu.memory_space<vmem>>, %arg4: memref<16x1xf32, #tpu.memory_space<vmem>>, %arg5: memref<1x1xf32, #tpu.memory_space<vmem>>, %arg6: memref<1x8xf32, #tpu.memory_space<vmem>>) attributes {dimension_semantics = [#tpu.dimension_semantics<parallel>], iteration_bounds = array<i64: 1>, scalar_prefetch = 0 : i64, scratch_operands = 0 : i64, tpu.core_type = #tpu.core_type<tc>, window_params = [{transform_indices = @transform_0, window_bounds = array<i64: 8, 32>}, {pipeline_mode = #tpu.pipeline_mode<synchronous>, transform_indices = @transform_1, window_bounds = array<i64: 16, 32>}, {pipeline_mode = #tpu.pipeline_mode<synchronous>, transform_indices = @transform_2, window_bounds = array<i64: 16, 1>}, {pipeline_mode = #tpu.pipeline_mode<synchronous>, transform_indices = @transform_3, window_bounds = array<i64: 16, 1>}, {pipeline_mode = #tpu.pipeline_mode<synchronous>, transform_indices = @transform_4, window_bounds = array<i64: 1, 1>}, {transform_indices = @transform_5, window_bounds = array<i64: 1, 8>}]} {
    %c0 = arith.constant 0 : index
    %c0_0 = arith.constant 0 : index
    %0 = vector.load %arg2[%c0, %c0_0] : memref<16x32xf32, #tpu.memory_space<vmem>>, vector<16x32xf32>
    %c0_1 = arith.constant 0 : index
    %c0_2 = arith.constant 0 : index
    %1 = vector.load %arg1[%c0_1, %c0_2] : memref<8x32xf32, #tpu.memory_space<vmem>>, vector<8x32xf32>
    %cst = arith.constant dense<0.000000e+00> : vector<16x8xf32>
    %2 = tpu.matmul %0, %1, %cst {dimension_numbers = #tpu.dot_dimension_numbers<[1], [1], [0], [0], [0, 0, 1, 0], [], []>} : vector<16x32xf32>, vector<8x32xf32>, vector<16x8xf32> -> vector<16x8xf32>
    %c0_3 = arith.constant 0 : index
    %c0_4 = arith.constant 0 : index
    %3 = vector.load %arg3[%c0_3, %c0_4] : memref<16x1xf32, #tpu.memory_space<vmem>>, vector<16x1xf32>
    %4 = vector.broadcast %3 : vector<16x1xf32> to vector<16x8xf32>
    %5 = arith.addf %2, %4 : vector<16x8xf32>
    %cst_5 = arith.constant 0.000000e+00 : f32
    %6 = vector.broadcast %cst_5 : f32 to vector<16x8xf32>
    %7 = arith.maximumf %5, %6 : vector<16x8xf32>
    %c0_6 = arith.constant 0 : index
    %c0_7 = arith.constant 0 : index
    %8 = vector.load %arg4[%c0_6, %c0_7] : memref<16x1xf32, #tpu.memory_space<vmem>>, vector<16x1xf32>
    %9 = vector.broadcast %8 : vector<16x1xf32> to vector<16x8xf32>
    %10 = arith.mulf %7, %9 : vector<16x8xf32>
    %cst_8 = arith.constant dense<0.000000e+00> : vector<8xf32>
    %11 = vector.multi_reduction <add>, %10, %cst_8 [0] : vector<16x8xf32> to vector<8xf32>
    %12 = vector.shape_cast %11 : vector<8xf32> to vector<1x8xf32>
    %c0_9 = arith.constant 0 : index
    %c0_10 = arith.constant 0 : index
    %13 = vector.load %arg5[%c0_9, %c0_10] : memref<1x1xf32, #tpu.memory_space<vmem>>, vector<1x1xf32>
    %14 = vector.broadcast %13 : vector<1x1xf32> to vector<1x8xf32>
    %15 = arith.addf %12, %14 : vector<1x8xf32>
    %c0_11 = arith.constant 0 : index
    %c0_12 = arith.constant 0 : index
    %16 = vector.load %arg6[%c0_11, %c0_12] : memref<1x8xf32, #tpu.memory_space<vmem>>, vector<1x8xf32>
    tpu.vector_store %arg6[%c0_11, %c0_12], %15 {strides = array<i32>} : memref<1x8xf32, #tpu.memory_space<vmem>>, vector<1x8xf32>,
    return
  }
  func.func @transform_0(%arg0: i32) -> (i32, i32) {
    %c0_i32 = arith.constant 0 : i32
    %c0_i32_0 = arith.constant 0 : i32
    return %arg0, %c0_i32 : i32, i32
  }
  func.func @transform_1(%arg0: i32) -> (i32, i32) {
    %c0_i32 = arith.constant 0 : i32
    %c0_i32_0 = arith.constant 0 : i32
    %c0_i32_1 = arith.constant 0 : i32
    return %c0_i32, %c0_i32_0 : i32, i32
  }
  func.func @transform_2(%arg0: i32) -> (i32, i32) {
    %c0_i32 = arith.constant 0 : i32
    %c0_i32_0 = arith.constant 0 : i32
    %c0_i32_1 = arith.constant 0 : i32
    return %c0_i32, %c0_i32_0 : i32, i32
  }
  func.func @transform_3(%arg0: i32) -> (i32, i32) {
    %c0_i32 = arith.constant 0 : i32
    %c0_i32_0 = arith.constant 0 : i32
    %c0_i32_1 = arith.constant 0 : i32
    return %c0_i32, %c0_i32_0 : i32, i32
  }
  func.func @transform_4(%arg0: i32) -> (i32, i32) {
    %c0_i32 = arith.constant 0 : i32
    %c0_i32_0 = arith.constant 0 : i32
    %c0_i32_1 = arith.constant 0 : i32
    return %c0_i32, %c0_i32_0 : i32, i32
  }
  func.func @transform_5(%arg0: i32) -> (i32, i32) {
    %c0_i32 = arith.constant 0 : i32
    %c0_i32_0 = arith.constant 0 : i32
    return %c0_i32, %arg0 : i32, i32
  }
}

</mosaic_0001>

<llo_original>
// kernel: tpu_custom_call.1
$region0: #{tpu_custom_call.1}
  #allocation0 [shape = 'u32[]', space=smem, size = 0x4, offset = 0x4, fixed_abs, tag = 'smem constant byte address 0x4 - core index']
  #allocation1 [shape = 'u32[144,128]{1,0:T(1,128)}', space=vmem, size = 0x12000, scoped, tag = 'internal scratch']
  #allocation2 [shape = 'f32[1,1]{1,0:T(1,128)S(1)}', space=vmem, size = 0x200, scoped, tag = 'scoped memory for tpu_custom_call.1']
  %s0 = inlined_call_operand.vmem [shape: f32[8,32], index: 0, kind: input, shape index: {}]
  %s1 = inlined_call_operand.vmem [shape: f32[16,32], index: 1, kind: input, shape index: {}]
  %s2 = inlined_call_operand.vmem [shape: f32[16,1], index: 2, kind: input, shape index: {}]
  %s3 = inlined_call_operand.vmem [shape: f32[16,1], index: 3, kind: input, shape index: {}]
  %s4 = inlined_call_operand.<no memory space> [shape: f32[1,1], index: 4, kind: input, shape index: {}]
  %s5 = inlined_call_operand.hbm [shape: f32[1,8], index: 5, kind: output, shape index: {}]
  %s6 = sld [smem:[#allocation0]]
  $region30: #{tpu_custom_call.1} parent=0
    _
  %s8 = ssub.s32 1, %s6
  %s9 = scalar_select 0, %s8, %s6
  %v10 = vstv %s4
  %11 = vst [vmem:[#allocation2] sm:$0x1] %v10
  $region1: #{tpu_custom_call.1} parent=0
    #allocation3 [shape = 'u8[512]{0}', space=vmem, size = 0x400, scoped, tag = 'output window, operand 0, single buffered']
    #allocation4 [shape = 's32[1]{0}', space=sflag, size = 0x4, scoped, tag = 'scoped memory for tpu_custom_call.1']
    %12 = vsyncpa [#allocation4], 0
    // Predicated region
    $region2: #{tpu_custom_call.1} parent=1 // pred_check
      _
    $region3: #{tpu_custom_call.1} parent=1 // pred_check_branch
      %14 = sbr.rel (0) target = $region5
    $region4: #{tpu_custom_call.1} parent=1 // pred_region
      _
    $region5: #{tpu_custom_call.1} parent=1 // pred_fallthru
      _
    // Predicated region
    $region6: #{tpu_custom_call.1} parent=1 // pred_check
      _
    $region7: #{tpu_custom_call.1} parent=1 // pred_check_branch
      %16 = sbr.rel (0) target = $region9
    $region8: #{tpu_custom_call.1} parent=1 // pred_region
      _
    $region9: #{tpu_custom_call.1} parent=1 // pred_fallthru
      _
    // Predicated region
    $region10: #{tpu_custom_call.1} parent=1 // pred_check
      _
    $region11: #{tpu_custom_call.1} parent=1 // pred_check_branch
      %18 = sbr.rel (0) target = $region13
    $region12: #{tpu_custom_call.1} parent=1 // pred_region
      _
    $region13: #{tpu_custom_call.1} parent=1 // pred_fallthru
      _
    // Predicated region
    $region14: #{tpu_custom_call.1} parent=1 // pred_check
      _
    $region15: #{tpu_custom_call.1} parent=1 // pred_check_branch
      %20 = sbr.rel (0) target = $region17
    $region16: #{tpu_custom_call.1} parent=1 // pred_region
      _
    $region17: #{tpu_custom_call.1} parent=1 // pred_fallthru
      _
    // Predicated region
    $region18: #{tpu_custom_call.1} parent=1 // pred_check
      _
    $region19: #{tpu_custom_call.1} parent=1 // pred_check_branch
      %22 = sbr.rel (0) target = $region21
    $region20: #{tpu_custom_call.1} parent=1 // pred_region
      _
    $region21: #{tpu_custom_call.1} parent=1 // pred_fallthru
      _
    %v23 = vld [vmem:[%s1] sm:$0xff]
    %v24 = vld [vmem:[%s1 + $0x8] sm:$0xff]
    %v25 = vld [vmem:[%s0] sm:$0xff]
    %v26 = vld [vmem:[%s2] sm:$0xff]
    %v27 = vld [vmem:[%s2 + $0x8] sm:$0xff]
    %29 = vset.pattern.permute.xlu0 0
    %30 = vperm.xlu0 %29, %v26
    %v31 = vpop.permute.xlu0 %30
    %34 = vset.pattern.permute.xlu0 0
    %35 = vperm.xlu0 %34, %v27
    %v36 = vpop.permute.xlu0 %35
    %vm38 = vcmask 261120
    %v40 = vsel %vm38, %v23, 0
    %v43 = vsel %vm38, %v24, 0
    %v46 = vsel %vm38, %v25, 0
    %48 = vmatprep.subr.mxu0 0.0
    %49 = vmatpush1.xpose.msra.mxu0 %v46
    %50 = vmatprep.subr.mxu0 0.0
    %51 = vmatpush1.xpose.msra.mxu0 0.0
    %52 = vmatprep.subr.mxu0 0.0
    %53 = vmatpush1.xpose.msra.mxu0 0.0
    %54 = vmatprep.subr.mxu0 0.0
    %55 = vmatpush1.xpose.msra.mxu0 0.0
    %56 = vmatprep.subr.mxu0 0.0
    %57 = vmatpush1.xpose.msra.mxu0 0.0
    %58 = vmatprep.subr.mxu0 0.0
    %59 = vmatpush1.xpose.msra.mxu0 0.0
    %60 = vmatprep.subr.mxu0 0.0
    %61 = vmatpush1.xpose.msra.mxu0 0.0
    %62 = vmatprep.subr.mxu0 0.0
    %63 = vmatpush1.xpose.msra.mxu0 0.0
    %64 = vmatprep.subr.mxu0 0.0
    %65 = vmatpush1.xpose.msra.mxu0 0.0
    %66 = vmatprep.subr.mxu0 0.0
    %67 = vmatpush1.xpose.msra.mxu0 0.0
    %68 = vmatprep.subr.mxu0 0.0
    %69 = vmatpush1.xpose.msra.mxu0 0.0
    %70 = vmatprep.subr.mxu0 0.0
    %71 = vmatpush1.xpose.msra.mxu0 0.0
    %72 = vmatprep.subr.mxu0 0.0
    %73 = vmatpush1.xpose.msra.mxu0 0.0
    %74 = vmatprep.subr.mxu0 0.0
    %75 = vmatpush1.xpose.msra.mxu0 0.0
    %76 = vmatprep.subr.mxu0 0.0
    %77 = vmatpush1.xpose.msra.mxu0 0.0
    %78 = vmatprep.subr.mxu0 0.0
    %79 = vmatpush1.xpose.msra.mxu0 0.0
    %80 = vmatprep.subr.mxu0 0.0
    %81 = vmatpush1.xpose.msra.mxu0 0.0
    %82 = vmatprep.subr.mxu0 0.0
    %83 = vmatpush1.xpose.msra.mxu0 0.0
    %84 = vmatprep.subr.mxu0 0.0
    %85 = vmatpush1.xpose.msra.mxu0 0.0
    %86 = vmatprep.subr.mxu0 0.0
    %87 = vmatpush1.xpose.msra.mxu0 0.0
    %88 = vmatprep.subr.mxu0 0.0
    %89 = vmatpush1.xpose.msra.mxu0 0.0
    %90 = vmatprep.subr.mxu0 0.0
    %91 = vmatpush1.xpose.msra.mxu0 0.0
    %92 = vmatprep.subr.mxu0 0.0
    %93 = vmatpush1.xpose.msra.mxu0 0.0
    %94 = vmatprep.subr.mxu0 0.0
    %95 = vmatpush1.xpose.msra.mxu0 0.0
    %96 = vmatprep.subr.mxu0 0.0
    %97 = vmatpush1.xpose.msra.mxu0 0.0
    %98 = vmatprep.subr.mxu0 0.0
    %99 = vmatpush1.xpose.msra.mxu0 0.0
    %100 = vmatprep.subr.mxu0 0.0
    %101 = vmatpush1.xpose.msra.mxu0 0.0
    %102 = vmatprep.subr.mxu0 0.0
    %103 = vmatpush1.xpose.msra.mxu0 0.0
    %104 = vmatprep.subr.mxu0 0.0
    %105 = vmatpush1.xpose.msra.mxu0 0.0
    %106 = vmatprep.subr.mxu0 0.0
    %107 = vmatpush1.xpose.msra.mxu0 0.0
    %108 = vmatprep.subr.mxu0 0.0
    %109 = vmatpush1.xpose.msra.mxu0 0.0
    %110 = vmatprep.subr.mxu0 0.0
    %111 = vmatpush1.xpose.msra.mxu0 0.0
    %112 = vmatprep.mubr.f32.mxu0 0.0
    %113 = vmatmul.mubr.f32.gmra.mrb[0].mxu0 %v40
    %v114 = vpop.f32.mrb[0].mxu0
    %v115 = vadd.f32 %v31, %v114
    %v116 = vpop.f32.mrb[0].mxu0
    %117 = vmatprep.mubr.f32.mxu0 0.0
    %118 = vmatmul.mubr.f32.gmra.mrb[0].mxu0 %v43
    %v119 = vpop.f32.mrb[0].mxu0
    %v120 = vadd.f32 %v36, %v119
    %v121 = vpop.f32.mrb[0].mxu0
    %122 = vdwg.mxu0
    %v123 = vmax.f32 %v115, 0.0
    %v124 = vmax.f32 %v120, 0.0
    %v125 = vld [vmem:[%s3] sm:$0xff]
    %v126 = vld [vmem:[%s3 + $0x8] sm:$0xff]
    %128 = vset.pattern.permute.xlu0 0
    %129 = vperm.xlu0 %128, %v125
    %v130 = vpop.permute.xlu0 %129
    %133 = vset.pattern.permute.xlu0 0
    %134 = vperm.xlu0 %133, %v126
    %v135 = vpop.permute.xlu0 %134
    %v137 = vmul.f32 %v123, %v130
    %v138 = vmul.f32 %v124, %v135
    %vm139 = vcmask 64512
    %v140 = vsel %vm139, %v137, 0.0
    %v141 = vsel %vm139, %v138, 0.0
    %v142 = vadd.f32 %v140, %v141
    %v143 = vrot.slane %v142, 4
    %v144 = vadd.f32 %v142, %v143
    %v145 = vrot.slane %v144, 2
    %v146 = vadd.f32 %v144, %v145
    %v147 = vrot.slane %v146, 1
    %v148 = vadd.f32 %v146, %v147
    %v149 = vld [vmem:[#allocation2] sm:$0x1]
    %151 = vset.pattern.permute.xlu0 0
    %152 = vperm.xlu0 %151, %v149
    %v153 = vpop.permute.xlu0 %152
    %v155 = vlaneseq
    %v156 = vshrl.u32 %v155, 7
    %v157 = vsub.s32 0, %v156
    %v158 = vrot.slane %v153, %v157
    %v159 = vadd.f32 %v148, %v158
    %vm160 = vcmask 57344
    %161 = vst.msk [vmem:[#allocation3] sm:$0x1] %vm160, %v159
    // Predicated region
    $region22: #{tpu_custom_call.1} parent=1 // pred_check
      _
    $region23: #{tpu_custom_call.1} parent=1 // pred_check_branch
      %163 = sbr.rel (0) target = $region25
    $region24: #{tpu_custom_call.1} parent=1 // pred_region
      %s165 = ssub.s32 16, 16
      %166 = vsyncadd [#allocation4], %s165
      %s168 = sshll.u32 [#allocation3], 4
      %s169 = int_to_ptr.vmem [resolvable:$true] %s168
      %171 = dma.vmem_to_hbm [thread:$0]  %s169, 16, %s5, [#allocation4]
    $region25: #{tpu_custom_call.1} parent=1 // pred_fallthru
      _
    // Predicated region
    $region26: #{tpu_custom_call.1} parent=1 // pred_check
      _
    $region27: #{tpu_custom_call.1} parent=1 // pred_check_branch
      %173 = sbr.rel (0) target = $region29
    $region28: #{tpu_custom_call.1} parent=1 // pred_region
      %174 = dma.done [#allocation4], 16
    $region29: #{tpu_custom_call.1} parent=1 // pred_fallthru
      _
    %175 = vsyncpa [#allocation4], 1

</llo_original>
